<compile_context>
chip_gen: v7x
topology: tpu7x:2x2x1
jax: 0.10.0
libtpu: 0.0.40
codegen_flags: <defaults>
</compile_context>

<pallas_src>
import functools
import math

import jax
import jax.numpy as jnp
from jax.experimental import pallas as pl
from jax.experimental.pallas import tpu as pltpu


# ----------------------------- fused Pallas kernel ---------------------------

def fused_mlp_gates_kernel(xg_ref, p1_ref, p2_ref, p3_ref, o_ref, *, hid):
    """Fused 3-layer MLP_gates forward with packed parameter slabs.

    xg = [x | g | 1]                     (B, in+gate+1)
    p1 = [[W1^T, 0, 0],[0, m1, m2],[b1,0,0]]   (in+gate+1, 3*hid)
    p2 = [W2^T ; b2]                     (hid+1, hid)
    p3 = [W3^T ; b3]                     (hid+1, out)
    """
    # Stage 1: one block-diagonal matmul -> [pre1 | gate1 | gate2]
    s1 = jnp.dot(xg_ref[...], p1_ref[...], preferred_element_type=jnp.float32)
    pre1 = s1[:, 0:hid]
    gate1 = s1[:, hid:2 * hid]
    gate2 = s1[:, 2 * hid:3 * hid]
    h = jnp.maximum(gate1 * pre1, 0.0)

    # Stage 2: gated hidden layer (bias = last row of slab, broadcast VPU add)
    pre2 = (jnp.dot(h, p2_ref[0:hid, :], preferred_element_type=jnp.float32)
            + p2_ref[hid:hid + 1, :])
    h = jnp.maximum(gate2 * pre2, 0.0)

    # Stage 3: plain fc + relu (final_gate=False, output='normal')
    pre3 = (jnp.dot(h, p3_ref[0:hid, :], preferred_element_type=jnp.float32)
            + p3_ref[hid:hid + 1, :])
    o_ref[...] = jnp.maximum(pre3, 0.0)


# ------------------------------- wrapper --------------------------------------

def _vmem_spec():
    # whole-array operand, VMEM-resident (gridless call)
    return pl.BlockSpec(memory_space=pltpu.MemorySpace.VMEM)


@jax.jit
def mlp_gates_forward(x, gate_input, packed):
    """MLP_gates.forward(x, gate_input=gate_input) — single fused pallas_call."""
    p1, p2, p3 = packed
    B = x.shape[0]
    hid = p2.shape[1]
    out = p3.shape[1]

    # [x | g | 1]: enables the block-diagonal stage-1 matmul + bias fold.
    ones = jnp.ones((B, 1), x.dtype)
    xg = jnp.concatenate([x, gate_input, ones], axis=-1)

    flops = 2 * B * (xg.shape[1] * p1.shape[1] + hid * hid + hid * out)
    bytes_accessed = 4 * (xg.size + p1.size + p2.size + p3.size + B * out)

    return pl.pallas_call(
        functools.partial(fused_mlp_gates_kernel, hid=hid),
        out_shape=jax.ShapeDtypeStruct((B, out), jnp.float32),
        in_specs=[_vmem_spec(), _vmem_spec(), _vmem_spec(), _vmem_spec()],
        out_specs=_vmem_spec(),
        cost_estimate=pl.CostEstimate(
            flops=flops, transcendentals=0, bytes_accessed=bytes_accessed),
    )(xg, p1, p2, p3)


# ------------------------------- parameters ----------------------------------

def init_mlp_gates_raw_params(key, size_per_layer, gate_size, gating_prop):
    """Mirror LinearExcitability.reset_parameters + fixed gate-mask init."""
    params = []
    n_layers = len(size_per_layer) - 1
    for lay_id in range(1, n_layers + 1):
        in_size = size_per_layer[lay_id - 1]
        out_size = size_per_layer[lay_id]
        key, kw, kb, km = jax.random.split(key, 4)
        stdv = 1.0 / math.sqrt(in_size)
        weight = jax.random.uniform(kw, (out_size, in_size), jnp.float32,
                                    minval=-stdv, maxval=stdv)
        bias = jax.random.uniform(kb, (out_size,), jnp.float32,
                                  minval=-stdv, maxval=stdv)
        is_last = (lay_id == n_layers)
        if gate_size > 0 and gating_prop > 0.0 and not is_last:
            # np.random.choice([0,1], p=[gating_prop, 1-gating_prop])
            gate_mask = jax.random.bernoulli(
                km, p=1.0 - gating_prop,
                shape=(gate_size, out_size)).astype(jnp.float32)
        else:
            gate_mask = None
        params.append({"wT": jnp.asarray(weight).T,   # [in, out]
                       "b": bias,                      # [out]
                       "gate_mask": gate_mask})        # [gate, out] or None
    return params


def pack_mlp_gates_params(raw_params, input_size, gate_size):
    """Pack 10 tiny tensors into 3 contiguous slabs (see kernel docstring)."""
    l1, l2, l3 = raw_params
    hid = l1["wT"].shape[1]
    assert l2["wT"].shape == (hid, hid)

    rows1 = input_size + gate_size + 1
    p1 = jnp.zeros((rows1, 3 * hid), jnp.float32)
    p1 = p1.at[:input_size, :hid].set(l1["wT"])                              # W1^T
    p1 = p1.at[input_size:input_size + gate_size, hid:2 * hid].set(l1["gate_mask"])
    p1 = p1.at[input_size:input_size + gate_size, 2 * hid:3 * hid].set(l2["gate_mask"])
    p1 = p1.at[input_size + gate_size, :hid].set(l1["b"])                    # b1 row

    p2 = jnp.concatenate([l2["wT"], l2["b"][None, :]], axis=0)   # (hid+1, hid)
    p3 = jnp.concatenate([l3["wT"], l3["b"][None, :]], axis=0)   # (hid+1, out)
    return (p1, p2, p3)


# pure-JAX reference (on the unpacked params) for verification
def mlp_gates_reference(x, gate_input, raw_params):
    h = x
    for layer in raw_params:
        pre = h @ layer["wT"] + layer["b"][None, :]
        if layer["gate_mask"] is not None:
            pre = (gate_input @ layer["gate_mask"]) * pre
        h = jnp.maximum(pre, 0.0)
    return h


if __name__ == "__main__":
    # small config: input=32, hidden=64,64, output=16; gate_size=8
    batch = 2
    input_size, hid_size, output_size = 32, 64, 16
    n_layers = 3
    gate_size, gating_prop = 8, 0.8
    size_per_layer = [input_size] + [hid_size] * (n_layers - 1) + [output_size]

    key = jax.random.PRNGKey(0)
    key, kx, kg, kp = jax.random.split(key, 4)
    x = jax.random.normal(kx, (batch, input_size), jnp.float32)
    gate_input = jax.random.normal(kg, (batch, gate_size), jnp.float32)

    raw = init_mlp_gates_raw_params(kp, size_per_layer, gate_size, gating_prop)
    packed = pack_mlp_gates_params(raw, input_size, gate_size)

    out = mlp_gates_forward(x, gate_input, packed)
    out = jax.block_until_ready(out)

    ref = mlp_gates_reference(x, gate_input, raw)
    assert out.shape == (batch, output_size)
    assert jnp.allclose(out, ref, atol=1e-4, rtol=1e-4)

    # TODO(synk): drop>0 (nn.Dropout) and batch_norm=True branches of the
    # original module are unused in this configuration and not implemented.
    print("KERNEL_OK")
</pallas_src>

<mosaic_0001>
module attributes {stable_mosaic.version = 11 : i64} {
  func.func @fused_mlp_gates_kernel(%arg0: memref<2x41xf32, #tpu.memory_space<vmem>>, %arg1: memref<41x192xf32, #tpu.memory_space<vmem>>, %arg2: memref<65x64xf32, #tpu.memory_space<vmem>>, %arg3: memref<65x16xf32, #tpu.memory_space<vmem>>, %arg4: memref<2x16xf32, #tpu.memory_space<vmem>>) attributes {dimension_semantics = [], scalar_prefetch = 0 : i64, scratch_operands = 0 : i64, tpu.core_type = #tpu.core_type<tc>} {
    %c0 = arith.constant 0 : index
    %c0_0 = arith.constant 0 : index
    %0 = vector.load %arg0[%c0, %c0_0] : memref<2x41xf32, #tpu.memory_space<vmem>>, vector<2x41xf32>
    %c0_1 = arith.constant 0 : index
    %c0_2 = arith.constant 0 : index
    %1 = vector.load %arg1[%c0_1, %c0_2] : memref<41x192xf32, #tpu.memory_space<vmem>>, vector<41x192xf32>
    %cst = arith.constant dense<0.000000e+00> : vector<2x192xf32>
    %2 = tpu.matmul %0, %1, %cst {dimension_numbers = #tpu.dot_dimension_numbers<[1], [0], [0], [1], [0, 0, 1, 1], [], []>} : vector<2x41xf32>, vector<41x192xf32>, vector<2x192xf32> -> vector<2x192xf32>
    %3 = vector.extract_strided_slice %2 {offsets = [0, 0], sizes = [2, 64], strides = [1, 1]} : vector<2x192xf32> to vector<2x64xf32>
    %4 = vector.extract_strided_slice %2 {offsets = [0, 64], sizes = [2, 64], strides = [1, 1]} : vector<2x192xf32> to vector<2x64xf32>
    %5 = vector.extract_strided_slice %2 {offsets = [0, 128], sizes = [2, 64], strides = [1, 1]} : vector<2x192xf32> to vector<2x64xf32>
    %6 = arith.mulf %4, %3 : vector<2x64xf32>
    %cst_3 = arith.constant 0.000000e+00 : f32
    %7 = vector.broadcast %cst_3 : f32 to vector<2x64xf32>
    %8 = arith.maximumf %6, %7 : vector<2x64xf32>
    %c0_4 = arith.constant 0 : index
    %c0_5 = arith.constant 0 : index
    %9 = vector.load %arg2[%c0_4, %c0_5] : memref<65x64xf32, #tpu.memory_space<vmem>>, vector<64x64xf32>
    %cst_6 = arith.constant dense<0.000000e+00> : vector<2x64xf32>
    %10 = tpu.matmul %8, %9, %cst_6 {dimension_numbers = #tpu.dot_dimension_numbers<[1], [0], [0], [1], [0, 0, 1, 1], [], []>} : vector<2x64xf32>, vector<64x64xf32>, vector<2x64xf32> -> vector<2x64xf32>
    %c64 = arith.constant 64 : index
    %c0_7 = arith.constant 0 : index
    %11 = vector.load %arg2[%c64, %c0_7] : memref<65x64xf32, #tpu.memory_space<vmem>>, vector<1x64xf32>
    %12 = vector.broadcast %11 : vector<1x64xf32> to vector<2x64xf32>
    %13 = arith.addf %10, %12 : vector<2x64xf32>
    %14 = arith.mulf %5, %13 : vector<2x64xf32>
    %cst_8 = arith.constant 0.000000e+00 : f32
    %15 = vector.broadcast %cst_8 : f32 to vector<2x64xf32>
    %16 = arith.maximumf %14, %15 : vector<2x64xf32>
    %c0_9 = arith.constant 0 : index
    %c0_10 = arith.constant 0 : index
    %17 = vector.load %arg3[%c0_9, %c0_10] : memref<65x16xf32, #tpu.memory_space<vmem>>, vector<64x16xf32>
    %cst_11 = arith.constant dense<0.000000e+00> : vector<2x16xf32>
    %18 = tpu.matmul %16, %17, %cst_11 {dimension_numbers = #tpu.dot_dimension_numbers<[1], [0], [0], [1], [0, 0, 1, 1], [], []>} : vector<2x64xf32>, vector<64x16xf32>, vector<2x16xf32> -> vector<2x16xf32>
    %c64_12 = arith.constant 64 : index
    %c0_13 = arith.constant 0 : index
    %19 = vector.load %arg3[%c64_12, %c0_13] : memref<65x16xf32, #tpu.memory_space<vmem>>, vector<1x16xf32>
    %20 = vector.broadcast %19 : vector<1x16xf32> to vector<2x16xf32>
    %21 = arith.addf %18, %20 : vector<2x16xf32>
    %cst_14 = arith.constant 0.000000e+00 : f32
    %22 = vector.broadcast %cst_14 : f32 to vector<2x16xf32>
    %23 = arith.maximumf %21, %22 : vector<2x16xf32>
    %c0_15 = arith.constant 0 : index
    %c0_16 = arith.constant 0 : index
    %24 = vector.load %arg4[%c0_15, %c0_16] : memref<2x16xf32, #tpu.memory_space<vmem>>, vector<2x16xf32>
    tpu.vector_store %arg4[%c0_15, %c0_16], %23 {strides = array<i32>} : memref<2x16xf32, #tpu.memory_space<vmem>>, vector<2x16xf32>,
    return
  }
}

</mosaic_0001>

<llo_original>
// kernel: mlp_gates_forward.1
$region0: #{mlp_gates_forward.1}
  #allocation0 [shape = 'u32[]', space=smem, size = 0x4, offset = 0x4, fixed_abs, tag = 'smem constant byte address 0x4 - core index']
  #allocation1 [shape = 'u32[144,128]{1,0:T(1,128)}', space=vmem, size = 0x12000, scoped, tag = 'internal scratch']
  %s0 = inlined_call_operand.vmem [shape: f32[2,41], index: 0, kind: input, shape index: {}]
  %s1 = inlined_call_operand.vmem [shape: f32[41,192], index: 1, kind: input, shape index: {}]
  %s2 = inlined_call_operand.vmem [shape: f32[65,64], index: 2, kind: input, shape index: {}]
  %s3 = inlined_call_operand.vmem [shape: f32[65,16], index: 3, kind: input, shape index: {}]
  %s4 = inlined_call_operand.hbm [shape: f32[2,16], index: 4, kind: output, shape index: {}]
  %s5 = sld [smem:[#allocation0]]
  $region26: #{mlp_gates_forward.1} parent=0
    _
  %s7 = ssub.s32 1, %s5
  %s8 = scalar_select 0, %s7, %s5
  $region1: #{mlp_gates_forward.1} parent=0
    #allocation2 [shape = 'u8[1024]{0}', space=vmem, size = 0x400, scoped, tag = 'output window, operand 0, single buffered']
    #allocation3 [shape = 's32[1]{0}', space=sflag, size = 0x4, scoped, tag = 'scoped memory for mlp_gates_forward.1']
    %9 = vsyncpa [#allocation3], 0
    // Predicated region
    $region2: #{mlp_gates_forward.1} parent=1 // pred_check
      _
    $region3: #{mlp_gates_forward.1} parent=1 // pred_check_branch
      %11 = sbr.rel (0) target = $region5
    $region4: #{mlp_gates_forward.1} parent=1 // pred_region
      _
    $region5: #{mlp_gates_forward.1} parent=1 // pred_fallthru
      _
    // Predicated region
    $region6: #{mlp_gates_forward.1} parent=1 // pred_check
      _
    $region7: #{mlp_gates_forward.1} parent=1 // pred_check_branch
      %13 = sbr.rel (0) target = $region9
    $region8: #{mlp_gates_forward.1} parent=1 // pred_region
      _
    $region9: #{mlp_gates_forward.1} parent=1 // pred_fallthru
      _
    // Predicated region
    $region10: #{mlp_gates_forward.1} parent=1 // pred_check
      _
    $region11: #{mlp_gates_forward.1} parent=1 // pred_check_branch
      %15 = sbr.rel (0) target = $region13
    $region12: #{mlp_gates_forward.1} parent=1 // pred_region
      _
    $region13: #{mlp_gates_forward.1} parent=1 // pred_fallthru
      _
    // Predicated region
    $region14: #{mlp_gates_forward.1} parent=1 // pred_check
      _
    $region15: #{mlp_gates_forward.1} parent=1 // pred_check_branch
      %17 = sbr.rel (0) target = $region17
    $region16: #{mlp_gates_forward.1} parent=1 // pred_region
      _
    $region17: #{mlp_gates_forward.1} parent=1 // pred_fallthru
      _
    %v18 = vld [vmem:[%s0] sm:$0x3]
    %v19 = vld [vmem:[%s1] sm:$0xff]
    %v20 = vld [vmem:[%s1 + $0x8] sm:$0xff]
    %v21 = vld [vmem:[%s1 + $0x10] sm:$0xff]
    %v22 = vld [vmem:[%s1 + $0x18] sm:$0xff]
    %v23 = vld [vmem:[%s1 + $0x20] sm:$0xff]
    %v24 = vld [vmem:[%s1 + $0x28] sm:$0xff]
    %v25 = vld [vmem:[%s1 + $0x30] sm:$0xff]
    %v26 = vld [vmem:[%s1 + $0x38] sm:$0xff]
    %v27 = vld [vmem:[%s1 + $0x40] sm:$0xff]
    %v28 = vld [vmem:[%s1 + $0x48] sm:$0xff]
    %v29 = vld [vmem:[%s1 + $0x50] sm:$0x1]
    %v30 = vld [vmem:[%s1 + $0x58] sm:$0x1]
    %vm31 = vcmask 334848
    %v33 = vsel %vm31, %v18, 0
    %vm35 = vcmask 1040384
    %v37 = vsel %vm35, %v29, 0
    %v40 = vsel %vm35, %v30, 0
    %42 = vmatprep.subr.mxu0 %v20
    %43 = vmatpush1.msra.mxu0 %v19
    %44 = vmatprep.subr.mxu0 %v22
    %45 = vmatpush1.msra.mxu0 %v21
    %46 = vmatprep.subr.mxu0 %v24
    %47 = vmatpush1.msra.mxu0 %v23
    %48 = vmatprep.subr.mxu0 %v26
    %49 = vmatpush1.msra.mxu0 %v25
    %50 = vmatprep.subr.mxu0 %v28
    %51 = vmatpush1.msra.mxu0 %v27
    %52 = vmatprep.subr.mxu0 %v40
    %53 = vmatpush1.msra.mxu0 %v37
    %54 = vmatprep.subr.mxu0 0.0
    %55 = vmatpush1.msra.mxu0 0.0
    %56 = vmatprep.subr.mxu0 0.0
    %57 = vmatpush1.msra.mxu0 0.0
    %58 = vmatprep.subr.mxu0 0.0
    %59 = vmatpush1.msra.mxu0 0.0
    %60 = vmatprep.subr.mxu0 0.0
    %61 = vmatpush1.msra.mxu0 0.0
    %62 = vmatprep.subr.mxu0 0.0
    %63 = vmatpush1.msra.mxu0 0.0
    %64 = vmatprep.subr.mxu0 0.0
    %65 = vmatpush1.msra.mxu0 0.0
    %66 = vmatprep.subr.mxu0 0.0
    %67 = vmatpush1.msra.mxu0 0.0
    %68 = vmatprep.subr.mxu0 0.0
    %69 = vmatpush1.msra.mxu0 0.0
    %70 = vmatprep.subr.mxu0 0.0
    %71 = vmatpush1.msra.mxu0 0.0
    %72 = vmatprep.subr.mxu0 0.0
    %73 = vmatpush1.msra.mxu0 0.0
    %74 = vmatprep.subr.mxu0 0.0
    %75 = vmatpush1.msra.mxu0 0.0
    %76 = vmatprep.subr.mxu0 0.0
    %77 = vmatpush1.msra.mxu0 0.0
    %78 = vmatprep.subr.mxu0 0.0
    %79 = vmatpush1.msra.mxu0 0.0
    %80 = vmatprep.subr.mxu0 0.0
    %81 = vmatpush1.msra.mxu0 0.0
    %82 = vmatprep.subr.mxu0 0.0
    %83 = vmatpush1.msra.mxu0 0.0
    %84 = vmatprep.subr.mxu0 0.0
    %85 = vmatpush1.msra.mxu0 0.0
    %86 = vmatprep.subr.mxu0 0.0
    %87 = vmatpush1.msra.mxu0 0.0
    %88 = vmatprep.subr.mxu0 0.0
    %89 = vmatpush1.msra.mxu0 0.0
    %90 = vmatprep.subr.mxu0 0.0
    %91 = vmatpush1.msra.mxu0 0.0
    %92 = vmatprep.subr.mxu0 0.0
    %93 = vmatpush1.msra.mxu0 0.0
    %94 = vmatprep.subr.mxu0 0.0
    %95 = vmatpush1.msra.mxu0 0.0
    %96 = vmatprep.subr.mxu0 0.0
    %97 = vmatpush1.msra.mxu0 0.0
    %98 = vmatprep.subr.mxu0 0.0
    %99 = vmatpush1.msra.mxu0 0.0
    %100 = vmatprep.subr.mxu0 0.0
    %101 = vmatpush1.msra.mxu0 0.0
    %102 = vmatprep.subr.mxu0 0.0
    %103 = vmatpush1.msra.mxu0 0.0
    %104 = vmatprep.subr.mxu0 0.0
    %105 = vmatpush1.msra.mxu0 0.0
    %106 = vmatprep.mubr.f32.mxu0 0.0
    %107 = vmatmul.mubr.f32.gmra.mrb[0].mxu0 %v33
    %v108 = vpop.f32.mrb[0].mxu0
    %v109 = vadd.f32 0.0, %v108
    %v110 = vpop.f32.mrb[0].mxu0
    %v111 = vadd.f32 0.0, %v110
    %112 = vdwg.mxu0
    %114 = vrot.lane.b32.xlu0 %v109, 64
    %v115 = vpop.permute.xlu0 %114
    %v117 = vmul.f32 %v109, %v115
    %v118 = vmax.f32 %v117, 0.0
    %v119 = vld [vmem:[%s2] sm:$0xff]
    %v120 = vld [vmem:[%s2 + $0x8] sm:$0xff]
    %v121 = vld [vmem:[%s2 + $0x10] sm:$0xff]
    %v122 = vld [vmem:[%s2 + $0x18] sm:$0xff]
    %v123 = vld [vmem:[%s2 + $0x20] sm:$0xff]
    %v124 = vld [vmem:[%s2 + $0x28] sm:$0xff]
    %v125 = vld [vmem:[%s2 + $0x30] sm:$0xff]
    %v126 = vld [vmem:[%s2 + $0x38] sm:$0xff]
    %v127 = vld [vmem:[%s2 + $0x40] sm:$0x1]
    %v128 = vlaneseq
    %v129 = vshrl.u32 %v128, 7
    %v130 = vsub.s32 0, %v129
    %v131 = vrot.slane %v127, %v130
    %133 = vrot.lane.b32.xlu0 %v118, 64
    %v134 = vpop.permute.xlu0 %133
    %vm135 = vcmask 523264
    %v136 = vsel %vm135, %v134, 0
    %138 = vmatprep.subr.mxu0 0.0
    %139 = vmatpush1.msra.mxu0 %v119
    %140 = vmatprep.subr.mxu0 0.0
    %141 = vmatpush1.msra.mxu0 %v120
    %142 = vmatprep.subr.mxu0 0.0
    %143 = vmatpush1.msra.mxu0 %v121
    %144 = vmatprep.subr.mxu0 0.0
    %145 = vmatpush1.msra.mxu0 %v122
    %146 = vmatprep.subr.mxu0 0.0
    %147 = vmatpush1.msra.mxu0 %v123
    %148 = vmatprep.subr.mxu0 0.0
    %149 = vmatpush1.msra.mxu0 %v124
    %150 = vmatprep.subr.mxu0 0.0
    %151 = vmatpush1.msra.mxu0 %v125
    %152 = vmatprep.subr.mxu0 0.0
    %153 = vmatpush1.msra.mxu0 %v126
    %154 = vmatprep.subr.mxu0 0.0
    %155 = vmatpush1.msra.mxu0 0.0
    %156 = vmatprep.subr.mxu0 0.0
    %157 = vmatpush1.msra.mxu0 0.0
    %158 = vmatprep.subr.mxu0 0.0
    %159 = vmatpush1.msra.mxu0 0.0
    %160 = vmatprep.subr.mxu0 0.0
    %161 = vmatpush1.msra.mxu0 0.0
    %162 = vmatprep.subr.mxu0 0.0
    %163 = vmatpush1.msra.mxu0 0.0
    %164 = vmatprep.subr.mxu0 0.0
    %165 = vmatpush1.msra.mxu0 0.0
    %166 = vmatprep.subr.mxu0 0.0
    %167 = vmatpush1.msra.mxu0 0.0
    %168 = vmatprep.subr.mxu0 0.0
    %169 = vmatpush1.msra.mxu0 0.0
    %170 = vmatprep.subr.mxu0 0.0
    %171 = vmatpush1.msra.mxu0 0.0
    %172 = vmatprep.subr.mxu0 0.0
    %173 = vmatpush1.msra.mxu0 0.0
    %174 = vmatprep.subr.mxu0 0.0
    %175 = vmatpush1.msra.mxu0 0.0
    %176 = vmatprep.subr.mxu0 0.0
    %177 = vmatpush1.msra.mxu0 0.0
    %178 = vmatprep.subr.mxu0 0.0
    %179 = vmatpush1.msra.mxu0 0.0
    %180 = vmatprep.subr.mxu0 0.0
    %181 = vmatpush1.msra.mxu0 0.0
    %182 = vmatprep.subr.mxu0 0.0
    %183 = vmatpush1.msra.mxu0 0.0
    %184 = vmatprep.subr.mxu0 0.0
    %185 = vmatpush1.msra.mxu0 0.0
    %186 = vmatprep.subr.mxu0 0.0
    %187 = vmatpush1.msra.mxu0 0.0
    %188 = vmatprep.subr.mxu0 0.0
    %189 = vmatpush1.msra.mxu0 0.0
    %190 = vmatprep.subr.mxu0 0.0
    %191 = vmatpush1.msra.mxu0 0.0
    %192 = vmatprep.subr.mxu0 0.0
    %193 = vmatpush1.msra.mxu0 0.0
    %194 = vmatprep.subr.mxu0 0.0
    %195 = vmatpush1.msra.mxu0 0.0
    %196 = vmatprep.subr.mxu0 0.0
    %197 = vmatpush1.msra.mxu0 0.0
    %198 = vmatprep.subr.mxu0 0.0
    %199 = vmatpush1.msra.mxu0 0.0
    %200 = vmatprep.subr.mxu0 0.0
    %201 = vmatpush1.msra.mxu0 0.0
    %202 = vmatprep.mubr.f32.mxu0 0.0
    %203 = vmatmul.mubr.f32.gmra.mrb[0].mxu0 %v136
    %v204 = vpop.f32.mrb[0].mxu0
    %v205 = vadd.f32 %v131, %v204
    %v206 = vpop.f32.mrb[0].mxu0
    %207 = vdwg.mxu0
    %v208 = vmul.f32 %v111, %v205
    %v209 = vmax.f32 %v208, 0.0
    %v210 = vld [vmem:[%s3] sm:$0xff]
    %v211 = vld [vmem:[%s3 + $0x8] sm:$0xff]
    %v212 = vld [vmem:[%s3 + $0x10] sm:$0xff]
    %v213 = vld [vmem:[%s3 + $0x18] sm:$0xff]
    %v214 = vld [vmem:[%s3 + $0x20] sm:$0xff]
    %v215 = vld [vmem:[%s3 + $0x28] sm:$0xff]
    %v216 = vld [vmem:[%s3 + $0x30] sm:$0xff]
    %v217 = vld [vmem:[%s3 + $0x38] sm:$0xff]
    %v218 = vld [vmem:[%s3 + $0x40] sm:$0x1]
    %v219 = vlaneseq
    %v220 = vshrl.u32 %v219, 7
    %v221 = vsub.s32 0, %v220
    %v222 = vrot.slane %v218, %v221
    %v224 = vsel %vm135, %v209, 0
    %226 = vmatprep.subr.mxu0 0.0
    %227 = vmatpush1.msra.mxu0 %v210
    %228 = vmatprep.subr.mxu0 0.0
    %229 = vmatpush1.msra.mxu0 %v211
    %230 = vmatprep.subr.mxu0 0.0
    %231 = vmatpush1.msra.mxu0 %v212
    %232 = vmatprep.subr.mxu0 0.0
    %233 = vmatpush1.msra.mxu0 %v213
    %234 = vmatprep.subr.mxu0 0.0
    %235 = vmatpush1.msra.mxu0 %v214
    %236 = vmatprep.subr.mxu0 0.0
    %237 = vmatpush1.msra.mxu0 %v215
    %238 = vmatprep.subr.mxu0 0.0
    %239 = vmatpush1.msra.mxu0 %v216
    %240 = vmatprep.subr.mxu0 0.0
    %241 = vmatpush1.msra.mxu0 %v217
    %242 = vmatprep.subr.mxu0 0.0
    %243 = vmatpush1.msra.mxu0 0.0
    %244 = vmatprep.subr.mxu0 0.0
    %245 = vmatpush1.msra.mxu0 0.0
    %246 = vmatprep.subr.mxu0 0.0
    %247 = vmatpush1.msra.mxu0 0.0
    %248 = vmatprep.subr.mxu0 0.0
    %249 = vmatpush1.msra.mxu0 0.0
    %250 = vmatprep.subr.mxu0 0.0
    %251 = vmatpush1.msra.mxu0 0.0
    %252 = vmatprep.subr.mxu0 0.0
    %253 = vmatpush1.msra.mxu0 0.0
    %254 = vmatprep.subr.mxu0 0.0
    %255 = vmatpush1.msra.mxu0 0.0
    %256 = vmatprep.subr.mxu0 0.0
    %257 = vmatpush1.msra.mxu0 0.0
    %258 = vmatprep.subr.mxu0 0.0
    %259 = vmatpush1.msra.mxu0 0.0
    %260 = vmatprep.subr.mxu0 0.0
    %261 = vmatpush1.msra.mxu0 0.0
    %262 = vmatprep.subr.mxu0 0.0
    %263 = vmatpush1.msra.mxu0 0.0
    %264 = vmatprep.subr.mxu0 0.0
    %265 = vmatpush1.msra.mxu0 0.0
    %266 = vmatprep.subr.mxu0 0.0
    %267 = vmatpush1.msra.mxu0 0.0
    %268 = vmatprep.subr.mxu0 0.0
    %269 = vmatpush1.msra.mxu0 0.0
    %270 = vmatprep.subr.mxu0 0.0
    %271 = vmatpush1.msra.mxu0 0.0
    %272 = vmatprep.subr.mxu0 0.0
    %273 = vmatpush1.msra.mxu0 0.0
    %274 = vmatprep.subr.mxu0 0.0
    %275 = vmatpush1.msra.mxu0 0.0
    %276 = vmatprep.subr.mxu0 0.0
    %277 = vmatpush1.msra.mxu0 0.0
    %278 = vmatprep.subr.mxu0 0.0
    %279 = vmatpush1.msra.mxu0 0.0
    %280 = vmatprep.subr.mxu0 0.0
    %281 = vmatpush1.msra.mxu0 0.0
    %282 = vmatprep.subr.mxu0 0.0
    %283 = vmatpush1.msra.mxu0 0.0
    %284 = vmatprep.subr.mxu0 0.0
    %285 = vmatpush1.msra.mxu0 0.0
    %286 = vmatprep.subr.mxu0 0.0
    %287 = vmatpush1.msra.mxu0 0.0
    %288 = vmatprep.subr.mxu0 0.0
    %289 = vmatpush1.msra.mxu0 0.0
    %290 = vmatprep.mubr.f32.mxu0 0.0
    %291 = vmatmul.mubr.f32.gmra.mrb[0].mxu0 %v224
    %v292 = vpop.f32.mrb[0].mxu0
    %v293 = vadd.f32 %v222, %v292
    %v294 = vpop.f32.mrb[0].mxu0
    %295 = vdwg.mxu0
    %v296 = vmax.f32 %v293, 0.0
    %vm297 = vcmask 123904
    %298 = vst.msk [vmem:[#allocation2] sm:$0x3] %vm297, %v296
    // Predicated region
    $region18: #{mlp_gates_forward.1} parent=1 // pred_check
      _
    $region19: #{mlp_gates_forward.1} parent=1 // pred_check_branch
      %300 = sbr.rel (0) target = $region21
    $region20: #{mlp_gates_forward.1} parent=1 // pred_region
      %s302 = ssub.s32 32, 32
      %303 = vsyncadd [#allocation3], %s302
      %s305 = sshll.u32 [#allocation2], 4
      %s306 = int_to_ptr.vmem [resolvable:$true] %s305
      %308 = dma.vmem_to_hbm [thread:$0]  %s306, 32, %s4, [#allocation3]
    $region21: #{mlp_gates_forward.1} parent=1 // pred_fallthru
      _
    // Predicated region
    $region22: #{mlp_gates_forward.1} parent=1 // pred_check
      _
    $region23: #{mlp_gates_forward.1} parent=1 // pred_check_branch
      %310 = sbr.rel (0) target = $region25
    $region24: #{mlp_gates_forward.1} parent=1 // pred_region
      %311 = dma.done [#allocation3], 32
    $region25: #{mlp_gates_forward.1} parent=1 // pred_fallthru
      _
    %312 = vsyncpa [#allocation3], 1

</llo_original>
